<compile_context>
chip_gen: v7x
topology: tpu7x:2x2x1
jax: 0.10.0
libtpu: 0.0.40
codegen_flags: <defaults>
</compile_context>

<pallas_src>
import jax
import jax.numpy as jnp
from jax.experimental import pallas as pl
from jax.experimental.pallas import tpu as pltpu

HIDDEN = 32
LANES = 128


def pinn_kernel(x_ref, w1_ref, b1_ref, w2_ref, b2_ref, y_ref):
    # x_ref / y_ref: (block_rows, 128) f32 tiles of the flattened batch.
    x = x_ref[...]
    # Hoisted broadcast of the output bias (single VPU broadcast per tile).
    acc = jnp.zeros_like(x) + b2_ref[0]
    # Unrolled over the 32 hidden units: scalar params from SMEM broadcast on
    # the VPU; tanh is pushed to the EUP (its own bundle slot).  No masked
    # stores, no MXU, no cross-lane traffic.
    for j in range(HIDDEN):
        h = jnp.tanh(x * w1_ref[j] + b1_ref[j])
        acc = acc + w2_ref[j] * h
    y_ref[...] = acc


def demo_pinn_forward(x, w1, b1, w2, b2, *, block_rows=256):
    """x: (N, 1) f32.  w1, b1, w2: (32,) f32.  b2: (1,) f32.  Returns (N, 1) f32.

    Equivalent to torch: tanh(x @ W1.T + b1) @ W2.T + b2 with
    w1 = linear1.weight[:, 0], b1 = linear1.bias,
    w2 = output.weight[0],     b2 = output.bias.
    """
    assert block_rows % 8 == 0
    n = x.shape[0]

    # Lane-dense view: pad N up so it reshapes to (rows, 128) with rows a
    # multiple of the block size (and of 8 for sublane tiling).
    rows_min = pl.cdiv(n, LANES)
    rows_min8 = ((rows_min + 7) // 8) * 8
    br = min(block_rows, rows_min8)
    rows = pl.cdiv(rows_min8, br) * br
    n_pad = rows * LANES

    xf = jnp.pad(jnp.reshape(x, (-1,)), (0, n_pad - n))
    x2d = xf.reshape(rows, LANES)

    smem = pl.BlockSpec(memory_space=pltpu.MemorySpace.SMEM)
    y2d = pl.pallas_call(
        pinn_kernel,
        out_shape=jax.ShapeDtypeStruct((rows, LANES), jnp.float32),
        grid=(rows // br,),
        in_specs=[
            pl.BlockSpec((br, LANES), lambda i: (i, 0)),   # x tile (pipelined)
            smem,                                          # w1 (32,)
            smem,                                          # b1 (32,)
            smem,                                          # w2 (32,)
            smem,                                          # b2 (1,)
        ],
        out_specs=pl.BlockSpec((br, LANES), lambda i: (i, 0)),
        compiler_params=pltpu.CompilerParams(
            dimension_semantics=("parallel",),             # megacore split on v7x
        ),
    )(x2d, w1, b1, w2, b2)

    return y2d.reshape(n_pad, 1)[:n]


def init_params(key):
    """Torch nn.Linear default init: U[-1/sqrt(fan_in), 1/sqrt(fan_in)], flattened."""
    k1, k2, k3, k4 = jax.random.split(key, 4)
    bound1 = 1.0 / jnp.sqrt(1.0)     # fan_in = 1
    bound2 = 1.0 / jnp.sqrt(32.0)    # fan_in = 32
    w1 = jax.random.uniform(k1, (HIDDEN,), jnp.float32, -bound1, bound1)
    b1 = jax.random.uniform(k2, (HIDDEN,), jnp.float32, -bound1, bound1)
    w2 = jax.random.uniform(k3, (HIDDEN,), jnp.float32, -bound2, bound2)
    b2 = jax.random.uniform(k4, (1,), jnp.float32, -bound2, bound2)
    return w1, b1, w2, b2


def reference(x, w1, b1, w2, b2):
    h = jnp.tanh(x * w1[None, :] + b1[None, :])           # (N, 32)
    return h @ w2[:, None] + b2[None, :]                  # (N, 1)


if __name__ == "__main__":
    key = jax.random.PRNGKey(0)
    k_x1, k_x2, k_p = jax.random.split(key, 3)
    w1, b1, w2, b2 = init_params(k_p)

    # Case 1: tiny batch, same shape as the torch demo (single grid step).
    x_small = jax.random.uniform(k_x1, (8, 1), jnp.float32)
    y_small = jax.block_until_ready(demo_pinn_forward(x_small, w1, b1, w2, b2))
    assert y_small.shape == (8, 1)
    assert jnp.allclose(y_small, reference(x_small, w1, b1, w2, b2),
                        atol=1e-4, rtol=1e-4)

    # Case 2: ragged batch exercising zero-padding + a multi-step pipelined grid.
    x_big = jax.random.uniform(k_x2, (1500, 1), jnp.float32) * 2.0 - 1.0
    y_big = jax.block_until_ready(
        demo_pinn_forward(x_big, w1, b1, w2, b2, block_rows=8))
    assert y_big.shape == (1500, 1)
    assert jnp.allclose(y_big, reference(x_big, w1, b1, w2, b2),
                        atol=1e-4, rtol=1e-4)

    print("KERNEL_OK")
</pallas_src>

<mosaic_0001>
module attributes {stable_mosaic.version = 11 : i64} {
  func.func @pinn_kernel(%arg0: i32, %arg1: memref<8x128xf32, #tpu.memory_space<vmem>>, %arg2: memref<32xf32, #tpu.memory_space<smem>>, %arg3: memref<32xf32, #tpu.memory_space<smem>>, %arg4: memref<32xf32, #tpu.memory_space<smem>>, %arg5: memref<1xf32, #tpu.memory_space<smem>>, %arg6: memref<8x128xf32, #tpu.memory_space<vmem>>) attributes {dimension_semantics = [#tpu.dimension_semantics<parallel>], iteration_bounds = array<i64: 1>, scalar_prefetch = 0 : i64, scratch_operands = 0 : i64, tpu.core_type = #tpu.core_type<tc>, window_params = [{transform_indices = @transform_0, window_bounds = array<i64: 8, 128>}, {transform_indices = @transform_1, window_bounds = array<i64: 32>}, {transform_indices = @transform_2, window_bounds = array<i64: 32>}, {transform_indices = @transform_3, window_bounds = array<i64: 32>}, {transform_indices = @transform_4, window_bounds = array<i64: 1>}, {transform_indices = @transform_5, window_bounds = array<i64: 8, 128>}]} {
    %c0 = arith.constant 0 : index
    %c0_0 = arith.constant 0 : index
    %0 = vector.load %arg1[%c0, %c0_0] : memref<8x128xf32, #tpu.memory_space<vmem>>, vector<8x128xf32>
    %cst = arith.constant 0.000000e+00 : f32
    %1 = vector.broadcast %cst : f32 to vector<8x128xf32>
    %c0_1 = arith.constant 0 : index
    %2 = memref.load %arg5[%c0_1] : memref<1xf32, #tpu.memory_space<smem>>
    %3 = vector.broadcast %2 : f32 to vector<8x128xf32>
    %4 = arith.addf %1, %3 : vector<8x128xf32>
    %c0_2 = arith.constant 0 : index
    %5 = memref.load %arg2[%c0_2] : memref<32xf32, #tpu.memory_space<smem>>
    %6 = vector.broadcast %5 : f32 to vector<8x128xf32>
    %7 = arith.mulf %0, %6 : vector<8x128xf32>
    %c0_3 = arith.constant 0 : index
    %8 = memref.load %arg3[%c0_3] : memref<32xf32, #tpu.memory_space<smem>>
    %9 = vector.broadcast %8 : f32 to vector<8x128xf32>
    %10 = arith.addf %7, %9 : vector<8x128xf32>
    %11 = math.tanh %10 : vector<8x128xf32>
    %c0_4 = arith.constant 0 : index
    %12 = memref.load %arg4[%c0_4] : memref<32xf32, #tpu.memory_space<smem>>
    %13 = vector.broadcast %12 : f32 to vector<8x128xf32>
    %14 = arith.mulf %13, %11 : vector<8x128xf32>
    %15 = arith.addf %4, %14 : vector<8x128xf32>
    %c1 = arith.constant 1 : index
    %16 = memref.load %arg2[%c1] : memref<32xf32, #tpu.memory_space<smem>>
    %17 = vector.broadcast %16 : f32 to vector<8x128xf32>
    %18 = arith.mulf %0, %17 : vector<8x128xf32>
    %c1_5 = arith.constant 1 : index
    %19 = memref.load %arg3[%c1_5] : memref<32xf32, #tpu.memory_space<smem>>
    %20 = vector.broadcast %19 : f32 to vector<8x128xf32>
    %21 = arith.addf %18, %20 : vector<8x128xf32>
    %22 = math.tanh %21 : vector<8x128xf32>
    %c1_6 = arith.constant 1 : index
    %23 = memref.load %arg4[%c1_6] : memref<32xf32, #tpu.memory_space<smem>>
    %24 = vector.broadcast %23 : f32 to vector<8x128xf32>
    %25 = arith.mulf %24, %22 : vector<8x128xf32>
    %26 = arith.addf %15, %25 : vector<8x128xf32>
    %c2 = arith.constant 2 : index
    %27 = memref.load %arg2[%c2] : memref<32xf32, #tpu.memory_space<smem>>
    %28 = vector.broadcast %27 : f32 to vector<8x128xf32>
    %29 = arith.mulf %0, %28 : vector<8x128xf32>
    %c2_7 = arith.constant 2 : index
    %30 = memref.load %arg3[%c2_7] : memref<32xf32, #tpu.memory_space<smem>>
    %31 = vector.broadcast %30 : f32 to vector<8x128xf32>
    %32 = arith.addf %29, %31 : vector<8x128xf32>
    %33 = math.tanh %32 : vector<8x128xf32>
    %c2_8 = arith.constant 2 : index
    %34 = memref.load %arg4[%c2_8] : memref<32xf32, #tpu.memory_space<smem>>
    %35 = vector.broadcast %34 : f32 to vector<8x128xf32>
    %36 = arith.mulf %35, %33 : vector<8x128xf32>
    %37 = arith.addf %26, %36 : vector<8x128xf32>
    %c3 = arith.constant 3 : index
    %38 = memref.load %arg2[%c3] : memref<32xf32, #tpu.memory_space<smem>>
    %39 = vector.broadcast %38 : f32 to vector<8x128xf32>
    %40 = arith.mulf %0, %39 : vector<8x128xf32>
    %c3_9 = arith.constant 3 : index
    %41 = memref.load %arg3[%c3_9] : memref<32xf32, #tpu.memory_space<smem>>
    %42 = vector.broadcast %41 : f32 to vector<8x128xf32>
    %43 = arith.addf %40, %42 : vector<8x128xf32>
    %44 = math.tanh %43 : vector<8x128xf32>
    %c3_10 = arith.constant 3 : index
    %45 = memref.load %arg4[%c3_10] : memref<32xf32, #tpu.memory_space<smem>>
    %46 = vector.broadcast %45 : f32 to vector<8x128xf32>
    %47 = arith.mulf %46, %44 : vector<8x128xf32>
    %48 = arith.addf %37, %47 : vector<8x128xf32>
    %c4 = arith.constant 4 : index
    %49 = memref.load %arg2[%c4] : memref<32xf32, #tpu.memory_space<smem>>
    %50 = vector.broadcast %49 : f32 to vector<8x128xf32>
    %51 = arith.mulf %0, %50 : vector<8x128xf32>
    %c4_11 = arith.constant 4 : index
    %52 = memref.load %arg3[%c4_11] : memref<32xf32, #tpu.memory_space<smem>>
    %53 = vector.broadcast %52 : f32 to vector<8x128xf32>
    %54 = arith.addf %51, %53 : vector<8x128xf32>
    %55 = math.tanh %54 : vector<8x128xf32>
    %c4_12 = arith.constant 4 : index
    %56 = memref.load %arg4[%c4_12] : memref<32xf32, #tpu.memory_space<smem>>
    %57 = vector.broadcast %56 : f32 to vector<8x128xf32>
    %58 = arith.mulf %57, %55 : vector<8x128xf32>
    %59 = arith.addf %48, %58 : vector<8x128xf32>
    %c5 = arith.constant 5 : index
    %60 = memref.load %arg2[%c5] : memref<32xf32, #tpu.memory_space<smem>>
    %61 = vector.broadcast %60 : f32 to vector<8x128xf32>
    %62 = arith.mulf %0, %61 : vector<8x128xf32>
    %c5_13 = arith.constant 5 : index
    %63 = memref.load %arg3[%c5_13] : memref<32xf32, #tpu.memory_space<smem>>
    %64 = vector.broadcast %63 : f32 to vector<8x128xf32>
    %65 = arith.addf %62, %64 : vector<8x128xf32>
    %66 = math.tanh %65 : vector<8x128xf32>
    %c5_14 = arith.constant 5 : index
    %67 = memref.load %arg4[%c5_14] : memref<32xf32, #tpu.memory_space<smem>>
    %68 = vector.broadcast %67 : f32 to vector<8x128xf32>
    %69 = arith.mulf %68, %66 : vector<8x128xf32>
    %70 = arith.addf %59, %69 : vector<8x128xf32>
    %c6 = arith.constant 6 : index
    %71 = memref.load %arg2[%c6] : memref<32xf32, #tpu.memory_space<smem>>
    %72 = vector.broadcast %71 : f32 to vector<8x128xf32>
    %73 = arith.mulf %0, %72 : vector<8x128xf32>
    %c6_15 = arith.constant 6 : index
    %74 = memref.load %arg3[%c6_15] : memref<32xf32, #tpu.memory_space<smem>>
    %75 = vector.broadcast %74 : f32 to vector<8x128xf32>
    %76 = arith.addf %73, %75 : vector<8x128xf32>
    %77 = math.tanh %76 : vector<8x128xf32>
    %c6_16 = arith.constant 6 : index
    %78 = memref.load %arg4[%c6_16] : memref<32xf32, #tpu.memory_space<smem>>
    %79 = vector.broadcast %78 : f32 to vector<8x128xf32>
    %80 = arith.mulf %79, %77 : vector<8x128xf32>
    %81 = arith.addf %70, %80 : vector<8x128xf32>
    %c7 = arith.constant 7 : index
    %82 = memref.load %arg2[%c7] : memref<32xf32, #tpu.memory_space<smem>>
    %83 = vector.broadcast %82 : f32 to vector<8x128xf32>
    %84 = arith.mulf %0, %83 : vector<8x128xf32>
    %c7_17 = arith.constant 7 : index
    %85 = memref.load %arg3[%c7_17] : memref<32xf32, #tpu.memory_space<smem>>
    %86 = vector.broadcast %85 : f32 to vector<8x128xf32>
    %87 = arith.addf %84, %86 : vector<8x128xf32>
    %88 = math.tanh %87 : vector<8x128xf32>
    %c7_18 = arith.constant 7 : index
    %89 = memref.load %arg4[%c7_18] : memref<32xf32, #tpu.memory_space<smem>>
    %90 = vector.broadcast %89 : f32 to vector<8x128xf32>
    %91 = arith.mulf %90, %88 : vector<8x128xf32>
    %92 = arith.addf %81, %91 : vector<8x128xf32>
    %c8 = arith.constant 8 : index
    %93 = memref.load %arg2[%c8] : memref<32xf32, #tpu.memory_space<smem>>
    %94 = vector.broadcast %93 : f32 to vector<8x128xf32>
    %95 = arith.mulf %0, %94 : vector<8x128xf32>
    %c8_19 = arith.constant 8 : index
    %96 = memref.load %arg3[%c8_19] : memref<32xf32, #tpu.memory_space<smem>>
    %97 = vector.broadcast %96 : f32 to vector<8x128xf32>
    %98 = arith.addf %95, %97 : vector<8x128xf32>
    %99 = math.tanh %98 : vector<8x128xf32>
    %c8_20 = arith.constant 8 : index
    %100 = memref.load %arg4[%c8_20] : memref<32xf32, #tpu.memory_space<smem>>
    %101 = vector.broadcast %100 : f32 to vector<8x128xf32>
    %102 = arith.mulf %101, %99 : vector<8x128xf32>
    %103 = arith.addf %92, %102 : vector<8x128xf32>
    %c9 = arith.constant 9 : index
    %104 = memref.load %arg2[%c9] : memref<32xf32, #tpu.memory_space<smem>>
    %105 = vector.broadcast %104 : f32 to vector<8x128xf32>
    %106 = arith.mulf %0, %105 : vector<8x128xf32>
    %c9_21 = arith.constant 9 : index
    %107 = memref.load %arg3[%c9_21] : memref<32xf32, #tpu.memory_space<smem>>
    %108 = vector.broadcast %107 : f32 to vector<8x128xf32>
    %109 = arith.addf %106, %108 : vector<8x128xf32>
    %110 = math.tanh %109 : vector<8x128xf32>
    %c9_22 = arith.constant 9 : index
    %111 = memref.load %arg4[%c9_22] : memref<32xf32, #tpu.memory_space<smem>>
    %112 = vector.broadcast %111 : f32 to vector<8x128xf32>
    %113 = arith.mulf %112, %110 : vector<8x128xf32>
    %114 = arith.addf %103, %113 : vector<8x128xf32>
    %c10 = arith.constant 10 : index
    %115 = memref.load %arg2[%c10] : memref<32xf32, #tpu.memory_space<smem>>
    %116 = vector.broadcast %115 : f32 to vector<8x128xf32>
    %117 = arith.mulf %0, %116 : vector<8x128xf32>
    %c10_23 = arith.constant 10 : index
    %118 = memref.load %arg3[%c10_23] : memref<32xf32, #tpu.memory_space<smem>>
    %119 = vector.broadcast %118 : f32 to vector<8x128xf32>
    %120 = arith.addf %117, %119 : vector<8x128xf32>
    %121 = math.tanh %120 : vector<8x128xf32>
    %c10_24 = arith.constant 10 : index
    %122 = memref.load %arg4[%c10_24] : memref<32xf32, #tpu.memory_space<smem>>
    %123 = vector.broadcast %122 : f32 to vector<8x128xf32>
    %124 = arith.mulf %123, %121 : vector<8x128xf32>
    %125 = arith.addf %114, %124 : vector<8x128xf32>
    %c11 = arith.constant 11 : index
    %126 = memref.load %arg2[%c11] : memref<32xf32, #tpu.memory_space<smem>>
    %127 = vector.broadcast %126 : f32 to vector<8x128xf32>
    %128 = arith.mulf %0, %127 : vector<8x128xf32>
    %c11_25 = arith.constant 11 : index
    %129 = memref.load %arg3[%c11_25] : memref<32xf32, #tpu.memory_space<smem>>
    %130 = vector.broadcast %129 : f32 to vector<8x128xf32>
    %131 = arith.addf %128, %130 : vector<8x128xf32>
    %132 = math.tanh %131 : vector<8x128xf32>
    %c11_26 = arith.constant 11 : index
    %133 = memref.load %arg4[%c11_26] : memref<32xf32, #tpu.memory_space<smem>>
    %134 = vector.broadcast %133 : f32 to vector<8x128xf32>
    %135 = arith.mulf %134, %132 : vector<8x128xf32>
    %136 = arith.addf %125, %135 : vector<8x128xf32>
    %c12 = arith.constant 12 : index
    %137 = memref.load %arg2[%c12] : memref<32xf32, #tpu.memory_space<smem>>
    %138 = vector.broadcast %137 : f32 to vector<8x128xf32>
    %139 = arith.mulf %0, %138 : vector<8x128xf32>
    %c12_27 = arith.constant 12 : index
    %140 = memref.load %arg3[%c12_27] : memref<32xf32, #tpu.memory_space<smem>>
    %141 = vector.broadcast %140 : f32 to vector<8x128xf32>
    %142 = arith.addf %139, %141 : vector<8x128xf32>
    %143 = math.tanh %142 : vector<8x128xf32>
    %c12_28 = arith.constant 12 : index
    %144 = memref.load %arg4[%c12_28] : memref<32xf32, #tpu.memory_space<smem>>
    %145 = vector.broadcast %144 : f32 to vector<8x128xf32>
    %146 = arith.mulf %145, %143 : vector<8x128xf32>
    %147 = arith.addf %136, %146 : vector<8x128xf32>
    %c13 = arith.constant 13 : index
    %148 = memref.load %arg2[%c13] : memref<32xf32, #tpu.memory_space<smem>>
    %149 = vector.broadcast %148 : f32 to vector<8x128xf32>
    %150 = arith.mulf %0, %149 : vector<8x128xf32>
    %c13_29 = arith.constant 13 : index
    %151 = memref.load %arg3[%c13_29] : memref<32xf32, #tpu.memory_space<smem>>
    %152 = vector.broadcast %151 : f32 to vector<8x128xf32>
    %153 = arith.addf %150, %152 : vector<8x128xf32>
    %154 = math.tanh %153 : vector<8x128xf32>
    %c13_30 = arith.constant 13 : index
    %155 = memref.load %arg4[%c13_30] : memref<32xf32, #tpu.memory_space<smem>>
    %156 = vector.broadcast %155 : f32 to vector<8x128xf32>
    %157 = arith.mulf %156, %154 : vector<8x128xf32>
    %158 = arith.addf %147, %157 : vector<8x128xf32>
    %c14 = arith.constant 14 : index
    %159 = memref.load %arg2[%c14] : memref<32xf32, #tpu.memory_space<smem>>
    %160 = vector.broadcast %159 : f32 to vector<8x128xf32>
    %161 = arith.mulf %0, %160 : vector<8x128xf32>
    %c14_31 = arith.constant 14 : index
    %162 = memref.load %arg3[%c14_31] : memref<32xf32, #tpu.memory_space<smem>>
    %163 = vector.broadcast %162 : f32 to vector<8x128xf32>
    %164 = arith.addf %161, %163 : vector<8x128xf32>
    %165 = math.tanh %164 : vector<8x128xf32>
    %c14_32 = arith.constant 14 : index
    %166 = memref.load %arg4[%c14_32] : memref<32xf32, #tpu.memory_space<smem>>
    %167 = vector.broadcast %166 : f32 to vector<8x128xf32>
    %168 = arith.mulf %167, %165 : vector<8x128xf32>
    %169 = arith.addf %158, %168 : vector<8x128xf32>
    %c15 = arith.constant 15 : index
    %170 = memref.load %arg2[%c15] : memref<32xf32, #tpu.memory_space<smem>>
    %171 = vector.broadcast %170 : f32 to vector<8x128xf32>
    %172 = arith.mulf %0, %171 : vector<8x128xf32>
    %c15_33 = arith.constant 15 : index
    %173 = memref.load %arg3[%c15_33] : memref<32xf32, #tpu.memory_space<smem>>
    %174 = vector.broadcast %173 : f32 to vector<8x128xf32>
    %175 = arith.addf %172, %174 : vector<8x128xf32>
    %176 = math.tanh %175 : vector<8x128xf32>
    %c15_34 = arith.constant 15 : index
    %177 = memref.load %arg4[%c15_34] : memref<32xf32, #tpu.memory_space<smem>>
    %178 = vector.broadcast %177 : f32 to vector<8x128xf32>
    %179 = arith.mulf %178, %176 : vector<8x128xf32>
    %180 = arith.addf %169, %179 : vector<8x128xf32>
    %c16 = arith.constant 16 : index
    %181 = memref.load %arg2[%c16] : memref<32xf32, #tpu.memory_space<smem>>
    %182 = vector.broadcast %181 : f32 to vector<8x128xf32>
    %183 = arith.mulf %0, %182 : vector<8x128xf32>
    %c16_35 = arith.constant 16 : index
    %184 = memref.load %arg3[%c16_35] : memref<32xf32, #tpu.memory_space<smem>>
    %185 = vector.broadcast %184 : f32 to vector<8x128xf32>
    %186 = arith.addf %183, %185 : vector<8x128xf32>
    %187 = math.tanh %186 : vector<8x128xf32>
    %c16_36 = arith.constant 16 : index
    %188 = memref.load %arg4[%c16_36] : memref<32xf32, #tpu.memory_space<smem>>
    %189 = vector.broadcast %188 : f32 to vector<8x128xf32>
    %190 = arith.mulf %189, %187 : vector<8x128xf32>
    %191 = arith.addf %180, %190 : vector<8x128xf32>
    %c17 = arith.constant 17 : index
    %192 = memref.load %arg2[%c17] : memref<32xf32, #tpu.memory_space<smem>>
    %193 = vector.broadcast %192 : f32 to vector<8x128xf32>
    %194 = arith.mulf %0, %193 : vector<8x128xf32>
    %c17_37 = arith.constant 17 : index
    %195 = memref.load %arg3[%c17_37] : memref<32xf32, #tpu.memory_space<smem>>
    %196 = vector.broadcast %195 : f32 to vector<8x128xf32>
    %197 = arith.addf %194, %196 : vector<8x128xf32>
    %198 = math.tanh %197 : vector<8x128xf32>
    %c17_38 = arith.constant 17 : index
    %199 = memref.load %arg4[%c17_38] : memref<32xf32, #tpu.memory_space<smem>>
    %200 = vector.broadcast %199 : f32 to vector<8x128xf32>
    %201 = arith.mulf %200, %198 : vector<8x128xf32>
    %202 = arith.addf %191, %201 : vector<8x128xf32>
    %c18 = arith.constant 18 : index
    %203 = memref.load %arg2[%c18] : memref<32xf32, #tpu.memory_space<smem>>
    %204 = vector.broadcast %203 : f32 to vector<8x128xf32>
    %205 = arith.mulf %0, %204 : vector<8x128xf32>
    %c18_39 = arith.constant 18 : index
    %206 = memref.load %arg3[%c18_39] : memref<32xf32, #tpu.memory_space<smem>>
    %207 = vector.broadcast %206 : f32 to vector<8x128xf32>
    %208 = arith.addf %205, %207 : vector<8x128xf32>
    %209 = math.tanh %208 : vector<8x128xf32>
    %c18_40 = arith.constant 18 : index
    %210 = memref.load %arg4[%c18_40] : memref<32xf32, #tpu.memory_space<smem>>
    %211 = vector.broadcast %210 : f32 to vector<8x128xf32>
    %212 = arith.mulf %211, %209 : vector<8x128xf32>
    %213 = arith.addf %202, %212 : vector<8x128xf32>
    %c19 = arith.constant 19 : index
    %214 = memref.load %arg2[%c19] : memref<32xf32, #tpu.memory_space<smem>>
    %215 = vector.broadcast %214 : f32 to vector<8x128xf32>
    %216 = arith.mulf %0, %215 : vector<8x128xf32>
    %c19_41 = arith.constant 19 : index
    %217 = memref.load %arg3[%c19_41] : memref<32xf32, #tpu.memory_space<smem>>
    %218 = vector.broadcast %217 : f32 to vector<8x128xf32>
    %219 = arith.addf %216, %218 : vector<8x128xf32>
    %220 = math.tanh %219 : vector<8x128xf32>
    %c19_42 = arith.constant 19 : index
    %221 = memref.load %arg4[%c19_42] : memref<32xf32, #tpu.memory_space<smem>>
    %222 = vector.broadcast %221 : f32 to vector<8x128xf32>
    %223 = arith.mulf %222, %220 : vector<8x128xf32>
    %224 = arith.addf %213, %223 : vector<8x128xf32>
    %c20 = arith.constant 20 : index
    %225 = memref.load %arg2[%c20] : memref<32xf32, #tpu.memory_space<smem>>
    %226 = vector.broadcast %225 : f32 to vector<8x128xf32>
    %227 = arith.mulf %0, %226 : vector<8x128xf32>
    %c20_43 = arith.constant 20 : index
    %228 = memref.load %arg3[%c20_43] : memref<32xf32, #tpu.memory_space<smem>>
    %229 = vector.broadcast %228 : f32 to vector<8x128xf32>
    %230 = arith.addf %227, %229 : vector<8x128xf32>
    %231 = math.tanh %230 : vector<8x128xf32>
    %c20_44 = arith.constant 20 : index
    %232 = memref.load %arg4[%c20_44] : memref<32xf32, #tpu.memory_space<smem>>
    %233 = vector.broadcast %232 : f32 to vector<8x128xf32>
    %234 = arith.mulf %233, %231 : vector<8x128xf32>
    %235 = arith.addf %224, %234 : vector<8x128xf32>
    %c21 = arith.constant 21 : index
    %236 = memref.load %arg2[%c21] : memref<32xf32, #tpu.memory_space<smem>>
    %237 = vector.broadcast %236 : f32 to vector<8x128xf32>
    %238 = arith.mulf %0, %237 : vector<8x128xf32>
    %c21_45 = arith.constant 21 : index
    %239 = memref.load %arg3[%c21_45] : memref<32xf32, #tpu.memory_space<smem>>
    %240 = vector.broadcast %239 : f32 to vector<8x128xf32>
    %241 = arith.addf %238, %240 : vector<8x128xf32>
    %242 = math.tanh %241 : vector<8x128xf32>
    %c21_46 = arith.constant 21 : index
    %243 = memref.load %arg4[%c21_46] : memref<32xf32, #tpu.memory_space<smem>>
    %244 = vector.broadcast %243 : f32 to vector<8x128xf32>
    %245 = arith.mulf %244, %242 : vector<8x128xf32>
    %246 = arith.addf %235, %245 : vector<8x128xf32>
    %c22 = arith.constant 22 : index
    %247 = memref.load %arg2[%c22] : memref<32xf32, #tpu.memory_space<smem>>
    %248 = vector.broadcast %247 : f32 to vector<8x128xf32>
    %249 = arith.mulf %0, %248 : vector<8x128xf32>
    %c22_47 = arith.constant 22 : index
    %250 = memref.load %arg3[%c22_47] : memref<32xf32, #tpu.memory_space<smem>>
    %251 = vector.broadcast %250 : f32 to vector<8x128xf32>
    %252 = arith.addf %249, %251 : vector<8x128xf32>
    %253 = math.tanh %252 : vector<8x128xf32>
    %c22_48 = arith.constant 22 : index
    %254 = memref.load %arg4[%c22_48] : memref<32xf32, #tpu.memory_space<smem>>
    %255 = vector.broadcast %254 : f32 to vector<8x128xf32>
    %256 = arith.mulf %255, %253 : vector<8x128xf32>
    %257 = arith.addf %246, %256 : vector<8x128xf32>
    %c23 = arith.constant 23 : index
    %258 = memref.load %arg2[%c23] : memref<32xf32, #tpu.memory_space<smem>>
    %259 = vector.broadcast %258 : f32 to vector<8x128xf32>
    %260 = arith.mulf %0, %259 : vector<8x128xf32>
    %c23_49 = arith.constant 23 : index
    %261 = memref.load %arg3[%c23_49] : memref<32xf32, #tpu.memory_space<smem>>
    %262 = vector.broadcast %261 : f32 to vector<8x128xf32>
    %263 = arith.addf %260, %262 : vector<8x128xf32>
    %264 = math.tanh %263 : vector<8x128xf32>
    %c23_50 = arith.constant 23 : index
    %265 = memref.load %arg4[%c23_50] : memref<32xf32, #tpu.memory_space<smem>>
    %266 = vector.broadcast %265 : f32 to vector<8x128xf32>
    %267 = arith.mulf %266, %264 : vector<8x128xf32>
    %268 = arith.addf %257, %267 : vector<8x128xf32>
    %c24 = arith.constant 24 : index
    %269 = memref.load %arg2[%c24] : memref<32xf32, #tpu.memory_space<smem>>
    %270 = vector.broadcast %269 : f32 to vector<8x128xf32>
    %271 = arith.mulf %0, %270 : vector<8x128xf32>
    %c24_51 = arith.constant 24 : index
    %272 = memref.load %arg3[%c24_51] : memref<32xf32, #tpu.memory_space<smem>>
    %273 = vector.broadcast %272 : f32 to vector<8x128xf32>
    %274 = arith.addf %271, %273 : vector<8x128xf32>
    %275 = math.tanh %274 : vector<8x128xf32>
    %c24_52 = arith.constant 24 : index
    %276 = memref.load %arg4[%c24_52] : memref<32xf32, #tpu.memory_space<smem>>
    %277 = vector.broadcast %276 : f32 to vector<8x128xf32>
    %278 = arith.mulf %277, %275 : vector<8x128xf32>
    %279 = arith.addf %268, %278 : vector<8x128xf32>
    %c25 = arith.constant 25 : index
    %280 = memref.load %arg2[%c25] : memref<32xf32, #tpu.memory_space<smem>>
    %281 = vector.broadcast %280 : f32 to vector<8x128xf32>
    %282 = arith.mulf %0, %281 : vector<8x128xf32>
    %c25_53 = arith.constant 25 : index
    %283 = memref.load %arg3[%c25_53] : memref<32xf32, #tpu.memory_space<smem>>
    %284 = vector.broadcast %283 : f32 to vector<8x128xf32>
    %285 = arith.addf %282, %284 : vector<8x128xf32>
    %286 = math.tanh %285 : vector<8x128xf32>
    %c25_54 = arith.constant 25 : index
    %287 = memref.load %arg4[%c25_54] : memref<32xf32, #tpu.memory_space<smem>>
    %288 = vector.broadcast %287 : f32 to vector<8x128xf32>
    %289 = arith.mulf %288, %286 : vector<8x128xf32>
    %290 = arith.addf %279, %289 : vector<8x128xf32>
    %c26 = arith.constant 26 : index
    %291 = memref.load %arg2[%c26] : memref<32xf32, #tpu.memory_space<smem>>
    %292 = vector.broadcast %291 : f32 to vector<8x128xf32>
    %293 = arith.mulf %0, %292 : vector<8x128xf32>
    %c26_55 = arith.constant 26 : index
    %294 = memref.load %arg3[%c26_55] : memref<32xf32, #tpu.memory_space<smem>>
    %295 = vector.broadcast %294 : f32 to vector<8x128xf32>
    %296 = arith.addf %293, %295 : vector<8x128xf32>
    %297 = math.tanh %296 : vector<8x128xf32>
    %c26_56 = arith.constant 26 : index
    %298 = memref.load %arg4[%c26_56] : memref<32xf32, #tpu.memory_space<smem>>
    %299 = vector.broadcast %298 : f32 to vector<8x128xf32>
    %300 = arith.mulf %299, %297 : vector<8x128xf32>
    %301 = arith.addf %290, %300 : vector<8x128xf32>
    %c27 = arith.constant 27 : index
    %302 = memref.load %arg2[%c27] : memref<32xf32, #tpu.memory_space<smem>>
    %303 = vector.broadcast %302 : f32 to vector<8x128xf32>
    %304 = arith.mulf %0, %303 : vector<8x128xf32>
    %c27_57 = arith.constant 27 : index
    %305 = memref.load %arg3[%c27_57] : memref<32xf32, #tpu.memory_space<smem>>
    %306 = vector.broadcast %305 : f32 to vector<8x128xf32>
    %307 = arith.addf %304, %306 : vector<8x128xf32>
    %308 = math.tanh %307 : vector<8x128xf32>
    %c27_58 = arith.constant 27 : index
    %309 = memref.load %arg4[%c27_58] : memref<32xf32, #tpu.memory_space<smem>>
    %310 = vector.broadcast %309 : f32 to vector<8x128xf32>
    %311 = arith.mulf %310, %308 : vector<8x128xf32>
    %312 = arith.addf %301, %311 : vector<8x128xf32>
    %c28 = arith.constant 28 : index
    %313 = memref.load %arg2[%c28] : memref<32xf32, #tpu.memory_space<smem>>
    %314 = vector.broadcast %313 : f32 to vector<8x128xf32>
    %315 = arith.mulf %0, %314 : vector<8x128xf32>
    %c28_59 = arith.constant 28 : index
    %316 = memref.load %arg3[%c28_59] : memref<32xf32, #tpu.memory_space<smem>>
    %317 = vector.broadcast %316 : f32 to vector<8x128xf32>
    %318 = arith.addf %315, %317 : vector<8x128xf32>
    %319 = math.tanh %318 : vector<8x128xf32>
    %c28_60 = arith.constant 28 : index
    %320 = memref.load %arg4[%c28_60] : memref<32xf32, #tpu.memory_space<smem>>
    %321 = vector.broadcast %320 : f32 to vector<8x128xf32>
    %322 = arith.mulf %321, %319 : vector<8x128xf32>
    %323 = arith.addf %312, %322 : vector<8x128xf32>
    %c29 = arith.constant 29 : index
    %324 = memref.load %arg2[%c29] : memref<32xf32, #tpu.memory_space<smem>>
    %325 = vector.broadcast %324 : f32 to vector<8x128xf32>
    %326 = arith.mulf %0, %325 : vector<8x128xf32>
    %c29_61 = arith.constant 29 : index
    %327 = memref.load %arg3[%c29_61] : memref<32xf32, #tpu.memory_space<smem>>
    %328 = vector.broadcast %327 : f32 to vector<8x128xf32>
    %329 = arith.addf %326, %328 : vector<8x128xf32>
    %330 = math.tanh %329 : vector<8x128xf32>
    %c29_62 = arith.constant 29 : index
    %331 = memref.load %arg4[%c29_62] : memref<32xf32, #tpu.memory_space<smem>>
    %332 = vector.broadcast %331 : f32 to vector<8x128xf32>
    %333 = arith.mulf %332, %330 : vector<8x128xf32>
    %334 = arith.addf %323, %333 : vector<8x128xf32>
    %c30 = arith.constant 30 : index
    %335 = memref.load %arg2[%c30] : memref<32xf32, #tpu.memory_space<smem>>
    %336 = vector.broadcast %335 : f32 to vector<8x128xf32>
    %337 = arith.mulf %0, %336 : vector<8x128xf32>
    %c30_63 = arith.constant 30 : index
    %338 = memref.load %arg3[%c30_63] : memref<32xf32, #tpu.memory_space<smem>>
    %339 = vector.broadcast %338 : f32 to vector<8x128xf32>
    %340 = arith.addf %337, %339 : vector<8x128xf32>
    %341 = math.tanh %340 : vector<8x128xf32>
    %c30_64 = arith.constant 30 : index
    %342 = memref.load %arg4[%c30_64] : memref<32xf32, #tpu.memory_space<smem>>
    %343 = vector.broadcast %342 : f32 to vector<8x128xf32>
    %344 = arith.mulf %343, %341 : vector<8x128xf32>
    %345 = arith.addf %334, %344 : vector<8x128xf32>
    %c31 = arith.constant 31 : index
    %346 = memref.load %arg2[%c31] : memref<32xf32, #tpu.memory_space<smem>>
    %347 = vector.broadcast %346 : f32 to vector<8x128xf32>
    %348 = arith.mulf %0, %347 : vector<8x128xf32>
    %c31_65 = arith.constant 31 : index
    %349 = memref.load %arg3[%c31_65] : memref<32xf32, #tpu.memory_space<smem>>
    %350 = vector.broadcast %349 : f32 to vector<8x128xf32>
    %351 = arith.addf %348, %350 : vector<8x128xf32>
    %352 = math.tanh %351 : vector<8x128xf32>
    %c31_66 = arith.constant 31 : index
    %353 = memref.load %arg4[%c31_66] : memref<32xf32, #tpu.memory_space<smem>>
    %354 = vector.broadcast %353 : f32 to vector<8x128xf32>
    %355 = arith.mulf %354, %352 : vector<8x128xf32>
    %356 = arith.addf %345, %355 : vector<8x128xf32>
    %c0_67 = arith.constant 0 : index
    %c0_68 = arith.constant 0 : index
    %357 = vector.load %arg6[%c0_67, %c0_68] : memref<8x128xf32, #tpu.memory_space<vmem>>, vector<8x128xf32>
    tpu.vector_store %arg6[%c0_67, %c0_68], %356 {strides = array<i32>} : memref<8x128xf32, #tpu.memory_space<vmem>>, vector<8x128xf32>,
    return
  }
  func.func @transform_0(%arg0: i32) -> (i32, i32) {
    %c0_i32 = arith.constant 0 : i32
    %c0_i32_0 = arith.constant 0 : i32
    return %arg0, %c0_i32 : i32, i32
  }
  func.func @transform_1(%arg0: i32) -> i32 {
    %c0_i32 = arith.constant 0 : i32
    %c0_i32_0 = arith.constant 0 : i32
    return %c0_i32 : i32
  }
  func.func @transform_2(%arg0: i32) -> i32 {
    %c0_i32 = arith.constant 0 : i32
    %c0_i32_0 = arith.constant 0 : i32
    return %c0_i32 : i32
  }
  func.func @transform_3(%arg0: i32) -> i32 {
    %c0_i32 = arith.constant 0 : i32
    %c0_i32_0 = arith.constant 0 : i32
    return %c0_i32 : i32
  }
  func.func @transform_4(%arg0: i32) -> i32 {
    %c0_i32 = arith.constant 0 : i32
    %c0_i32_0 = arith.constant 0 : i32
    return %c0_i32 : i32
  }
  func.func @transform_5(%arg0: i32) -> (i32, i32) {
    %c0_i32 = arith.constant 0 : i32
    %c0_i32_0 = arith.constant 0 : i32
    return %arg0, %c0_i32 : i32, i32
  }
}

</mosaic_0001>

<llo_original>
// kernel: tpu_custom_call.1
$region0: #{tpu_custom_call.1}
  #allocation0 [shape = 'u32[]', space=smem, size = 0x4, offset = 0x4, fixed_abs, tag = 'smem constant byte address 0x4 - core index']
  #allocation1 [shape = 'u32[144,128]{1,0:T(1,128)}', space=vmem, size = 0x12000, scoped, tag = 'internal scratch']
  #allocation2 [shape = 'f32[1]{0:T(128)S(6)}', space=smem, size = 0x200, scoped, tag = 'scoped memory for tpu_custom_call.1']
  %s0 = inlined_call_operand.hbm [shape: f32[8,128], index: 0, kind: input, shape index: {}]
  %s1 = inlined_call_operand.vmem [shape: f32[32], index: 1, kind: input, shape index: {}]
  %s2 = inlined_call_operand.vmem [shape: f32[32], index: 2, kind: input, shape index: {}]
  %s3 = inlined_call_operand.vmem [shape: f32[32], index: 3, kind: input, shape index: {}]
  %s4 = inlined_call_operand.<no memory space> [shape: f32[1], index: 4, kind: input, shape index: {}]
  %s5 = inlined_call_operand.hbm [shape: f32[8,128], index: 5, kind: output, shape index: {}]
  %s6 = sld [smem:[#allocation0]]
  $region46: #{tpu_custom_call.1} parent=0
    _
  %s8 = ssub.s32 1, %s6
  %s9 = scalar_select 0, %s8, %s6
  %10 = sst [smem:[#allocation2]] %s4
  $region1: #{tpu_custom_call.1} parent=0
    #allocation3 [shape = 'u8[4096]{0}', space=vmem, size = 0x1000, scoped, tag = 'input window, operand 0, single buffered']
    #allocation4 [shape = 's32[1]{0}', space=sflag, size = 0x4, scoped, tag = 'scoped memory for tpu_custom_call.1']
    #allocation5 [shape = 's32[1]{0}', space=sflag, size = 0x4, scoped, tag = 'scoped memory for tpu_custom_call.1']
    #allocation6 [shape = 's32[1]{0}', space=sflag, size = 0x4, scoped, tag = 'scoped memory for tpu_custom_call.1']
    #allocation7 [shape = 'u8[512]{0}', space=smem, size = 0x200, scoped, tag = 'input window, operand 1, single buffered']
    #allocation8 [shape = 'u8[512]{0}', space=smem, size = 0x200, scoped, tag = 'input window, operand 2, single buffered']
    #allocation9 [shape = 's32[1]{0}', space=sflag, size = 0x4, scoped, tag = 'scoped memory for tpu_custom_call.1']
    #allocation10 [shape = 'u8[512]{0}', space=smem, size = 0x200, scoped, tag = 'input window, operand 3, single buffered']
    #allocation11 [shape = 'u8[4096]{0}', space=vmem, size = 0x1000, scoped, tag = 'output window, operand 0, single buffered']
    %11 = vsyncpa [#allocation4], 0
    %12 = vsyncpa [#allocation6], 0
    %13 = vsyncpa [#allocation9], 0
    %14 = vsyncpa [#allocation5], 0
    // Predicated region
    $region2: #{tpu_custom_call.1} parent=1 // pred_check
      _
    $region3: #{tpu_custom_call.1} parent=1 // pred_check_branch
      %16 = sbr.rel (0) target = $region5
    $region4: #{tpu_custom_call.1} parent=1 // pred_region
      %s18 = ssub.s32 128, 128
      %19 = vsyncadd [#allocation4], %s18
      %s21 = sshll.u32 [#allocation3], 4
      %s22 = int_to_ptr.vmem [resolvable:$true] %s21
      %24 = dma.hbm_to_vmem [thread:$0]  %s0, 128, %s22, [#allocation4]
    $region5: #{tpu_custom_call.1} parent=1 // pred_fallthru
      _
    // Predicated region
    $region6: #{tpu_custom_call.1} parent=1 // pred_check
      _
    $region7: #{tpu_custom_call.1} parent=1 // pred_check_branch
      %26 = sbr.rel (0) target = $region9
    $region8: #{tpu_custom_call.1} parent=1 // pred_region
      %s28 = ssub.s32 16, 16
      %29 = vsyncadd [#allocation6], %s28
      %s31 = sshll.u32 %s1, 4
      %s32 = int_to_ptr.vmem [resolvable:$true] %s31
      %34 = dma.vmem_to_smem %s32, 16, [#allocation7], [#allocation6]
    $region9: #{tpu_custom_call.1} parent=1 // pred_fallthru
      _
    // Predicated region
    $region10: #{tpu_custom_call.1} parent=1 // pred_check
      _
    $region11: #{tpu_custom_call.1} parent=1 // pred_check_branch
      %36 = sbr.rel (0) target = $region13
    $region12: #{tpu_custom_call.1} parent=1 // pred_region
      %s38 = ssub.s32 16, 16
      %39 = vsyncadd [#allocation9], %s38
      %s41 = sshll.u32 %s2, 4
      %s42 = int_to_ptr.vmem [resolvable:$true] %s41
      %44 = dma.vmem_to_smem %s42, 16, [#allocation8], [#allocation9]
    $region13: #{tpu_custom_call.1} parent=1 // pred_fallthru
      _
    // Predicated region
    $region14: #{tpu_custom_call.1} parent=1 // pred_check
      _
    $region15: #{tpu_custom_call.1} parent=1 // pred_check_branch
      %46 = sbr.rel (0) target = $region17
    $region16: #{tpu_custom_call.1} parent=1 // pred_region
      %s48 = ssub.s32 16, 16
      %49 = vsyncadd [#allocation9], %s48
      %s51 = sshll.u32 %s3, 4
      %s52 = int_to_ptr.vmem [resolvable:$true] %s51
      %54 = dma.vmem_to_smem %s52, 16, [#allocation10], [#allocation9]
    $region17: #{tpu_custom_call.1} parent=1 // pred_fallthru
      _
    // Predicated region
    $region18: #{tpu_custom_call.1} parent=1 // pred_check
      _
    $region19: #{tpu_custom_call.1} parent=1 // pred_check_branch
      %56 = sbr.rel (0) target = $region21
    $region20: #{tpu_custom_call.1} parent=1 // pred_region
      _
    $region21: #{tpu_custom_call.1} parent=1 // pred_fallthru
      _
    // Predicated region
    $region22: #{tpu_custom_call.1} parent=1 // pred_check
      _
    $region23: #{tpu_custom_call.1} parent=1 // pred_check_branch
      %58 = sbr.rel (0) target = $region25
    $region24: #{tpu_custom_call.1} parent=1 // pred_region
      %59 = dma.done [#allocation4], 128
    $region25: #{tpu_custom_call.1} parent=1 // pred_fallthru
      _
    // Predicated region
    $region26: #{tpu_custom_call.1} parent=1 // pred_check
      _
    $region27: #{tpu_custom_call.1} parent=1 // pred_check_branch
      %61 = sbr.rel (0) target = $region29
    $region28: #{tpu_custom_call.1} parent=1 // pred_region
      %62 = dma.done [#allocation6], 16
    $region29: #{tpu_custom_call.1} parent=1 // pred_fallthru
      _
    // Predicated region
    $region30: #{tpu_custom_call.1} parent=1 // pred_check
      _
    $region31: #{tpu_custom_call.1} parent=1 // pred_check_branch
      %64 = sbr.rel (0) target = $region33
    $region32: #{tpu_custom_call.1} parent=1 // pred_region
      %65 = dma.done [#allocation9], 16
    $region33: #{tpu_custom_call.1} parent=1 // pred_fallthru
      _
    // Predicated region
    $region34: #{tpu_custom_call.1} parent=1 // pred_check
      _
    $region35: #{tpu_custom_call.1} parent=1 // pred_check_branch
      %67 = sbr.rel (0) target = $region37
    $region36: #{tpu_custom_call.1} parent=1 // pred_region
      %68 = dma.done [#allocation9], 16
    $region37: #{tpu_custom_call.1} parent=1 // pred_fallthru
      _
    %69 = sfence
    %v70 = vld [vmem:[#allocation3] sm:$0xff]
    %s71 = sld [smem:[#allocation2]]
    %v72 = vstv %s71
    %v73 = vadd.f32 %v72, 0.0
    %s74 = sld [smem:[#allocation7]]
    %v75 = vstv %s74
    %v76 = vmul.f32 %v70, %v75
    %s77 = sld [smem:[#allocation8]]
    %v78 = vstv %s77
    %v79 = vadd.f32 %v76, %v78
    %v80 = vtanh.pop %v79
    %s81 = sld [smem:[#allocation10]]
    %v82 = vstv %s81
    %v83 = vmul.f32 %v82, %v80
    %v84 = vadd.f32 %v73, %v83
    %s85 = sld [smem:[#allocation7 + $0x1]]
    %v86 = vstv %s85
    %v87 = vmul.f32 %v70, %v86
    %s88 = sld [smem:[#allocation8 + $0x1]]
    %v89 = vstv %s88
    %v90 = vadd.f32 %v87, %v89
    %v91 = vtanh.pop %v90
    %s92 = sld [smem:[#allocation10 + $0x1]]
    %v93 = vstv %s92
    %v94 = vmul.f32 %v93, %v91
    %v95 = vadd.f32 %v84, %v94
    %s96 = sld [smem:[#allocation7 + $0x2]]
    %v97 = vstv %s96
    %v98 = vmul.f32 %v70, %v97
    %s99 = sld [smem:[#allocation8 + $0x2]]
    %v100 = vstv %s99
    %v101 = vadd.f32 %v98, %v100
    %v102 = vtanh.pop %v101
    %s103 = sld [smem:[#allocation10 + $0x2]]
    %v104 = vstv %s103
    %v105 = vmul.f32 %v104, %v102
    %v106 = vadd.f32 %v95, %v105
    %s107 = sld [smem:[#allocation7 + $0x3]]
    %v108 = vstv %s107
    %v109 = vmul.f32 %v70, %v108
    %s110 = sld [smem:[#allocation8 + $0x3]]
    %v111 = vstv %s110
    %v112 = vadd.f32 %v109, %v111
    %v113 = vtanh.pop %v112
    %s114 = sld [smem:[#allocation10 + $0x3]]
    %v115 = vstv %s114
    %v116 = vmul.f32 %v115, %v113
    %v117 = vadd.f32 %v106, %v116
    %s118 = sld [smem:[#allocation7 + $0x4]]
    %v119 = vstv %s118
    %v120 = vmul.f32 %v70, %v119
    %s121 = sld [smem:[#allocation8 + $0x4]]
    %v122 = vstv %s121
    %v123 = vadd.f32 %v120, %v122
    %v124 = vtanh.pop %v123
    %s125 = sld [smem:[#allocation10 + $0x4]]
    %v126 = vstv %s125
    %v127 = vmul.f32 %v126, %v124
    %v128 = vadd.f32 %v117, %v127
    %s129 = sld [smem:[#allocation7 + $0x5]]
    %v130 = vstv %s129
    %v131 = vmul.f32 %v70, %v130
    %s132 = sld [smem:[#allocation8 + $0x5]]
    %v133 = vstv %s132
    %v134 = vadd.f32 %v131, %v133
    %v135 = vtanh.pop %v134
    %s136 = sld [smem:[#allocation10 + $0x5]]
    %v137 = vstv %s136
    %v138 = vmul.f32 %v137, %v135
    %v139 = vadd.f32 %v128, %v138
    %s140 = sld [smem:[#allocation7 + $0x6]]
    %v141 = vstv %s140
    %v142 = vmul.f32 %v70, %v141
    %s143 = sld [smem:[#allocation8 + $0x6]]
    %v144 = vstv %s143
    %v145 = vadd.f32 %v142, %v144
    %v146 = vtanh.pop %v145
    %s147 = sld [smem:[#allocation10 + $0x6]]
    %v148 = vstv %s147
    %v149 = vmul.f32 %v148, %v146
    %v150 = vadd.f32 %v139, %v149
    %s151 = sld [smem:[#allocation7 + $0x7]]
    %v152 = vstv %s151
    %v153 = vmul.f32 %v70, %v152
    %s154 = sld [smem:[#allocation8 + $0x7]]
    %v155 = vstv %s154
    %v156 = vadd.f32 %v153, %v155
    %v157 = vtanh.pop %v156
    %s158 = sld [smem:[#allocation10 + $0x7]]
    %v159 = vstv %s158
    %v160 = vmul.f32 %v159, %v157
    %v161 = vadd.f32 %v150, %v160
    %s162 = sld [smem:[#allocation7 + $0x8]]
    %v163 = vstv %s162
    %v164 = vmul.f32 %v70, %v163
    %s165 = sld [smem:[#allocation8 + $0x8]]
    %v166 = vstv %s165
    %v167 = vadd.f32 %v164, %v166
    %v168 = vtanh.pop %v167
    %s169 = sld [smem:[#allocation10 + $0x8]]
    %v170 = vstv %s169
    %v171 = vmul.f32 %v170, %v168
    %v172 = vadd.f32 %v161, %v171
    %s173 = sld [smem:[#allocation7 + $0x9]]
    %v174 = vstv %s173
    %v175 = vmul.f32 %v70, %v174
    %s176 = sld [smem:[#allocation8 + $0x9]]
    %v177 = vstv %s176
    %v178 = vadd.f32 %v175, %v177
    %v179 = vtanh.pop %v178
    %s180 = sld [smem:[#allocation10 + $0x9]]
    %v181 = vstv %s180
    %v182 = vmul.f32 %v181, %v179
    %v183 = vadd.f32 %v172, %v182
    %s184 = sld [smem:[#allocation7 + $0xa]]
    %v185 = vstv %s184
    %v186 = vmul.f32 %v70, %v185
    %s187 = sld [smem:[#allocation8 + $0xa]]
    %v188 = vstv %s187
    %v189 = vadd.f32 %v186, %v188
    %v190 = vtanh.pop %v189
    %s191 = sld [smem:[#allocation10 + $0xa]]
    %v192 = vstv %s191
    %v193 = vmul.f32 %v192, %v190
    %v194 = vadd.f32 %v183, %v193
    %s195 = sld [smem:[#allocation7 + $0xb]]
    %v196 = vstv %s195
    %v197 = vmul.f32 %v70, %v196
    %s198 = sld [smem:[#allocation8 + $0xb]]
    %v199 = vstv %s198
    %v200 = vadd.f32 %v197, %v199
    %v201 = vtanh.pop %v200
    %s202 = sld [smem:[#allocation10 + $0xb]]
    %v203 = vstv %s202
    %v204 = vmul.f32 %v203, %v201
    %v205 = vadd.f32 %v194, %v204
    %s206 = sld [smem:[#allocation7 + $0xc]]
    %v207 = vstv %s206
    %v208 = vmul.f32 %v70, %v207
    %s209 = sld [smem:[#allocation8 + $0xc]]
    %v210 = vstv %s209
    %v211 = vadd.f32 %v208, %v210
    %v212 = vtanh.pop %v211
    %s213 = sld [smem:[#allocation10 + $0xc]]
    %v214 = vstv %s213
    %v215 = vmul.f32 %v214, %v212
    %v216 = vadd.f32 %v205, %v215
    %s217 = sld [smem:[#allocation7 + $0xd]]
    %v218 = vstv %s217
    %v219 = vmul.f32 %v70, %v218
    %s220 = sld [smem:[#allocation8 + $0xd]]
    %v221 = vstv %s220
    %v222 = vadd.f32 %v219, %v221
    %v223 = vtanh.pop %v222
    %s224 = sld [smem:[#allocation10 + $0xd]]
    %v225 = vstv %s224
    %v226 = vmul.f32 %v225, %v223
    %v227 = vadd.f32 %v216, %v226
    %s228 = sld [smem:[#allocation7 + $0xe]]
    %v229 = vstv %s228
    %v230 = vmul.f32 %v70, %v229
    %s231 = sld [smem:[#allocation8 + $0xe]]
    %v232 = vstv %s231
    %v233 = vadd.f32 %v230, %v232
    %v234 = vtanh.pop %v233
    %s235 = sld [smem:[#allocation10 + $0xe]]
    %v236 = vstv %s235
    %v237 = vmul.f32 %v236, %v234
    %v238 = vadd.f32 %v227, %v237
    %s239 = sld [smem:[#allocation7 + $0xf]]
    %v240 = vstv %s239
    %v241 = vmul.f32 %v70, %v240
    %s242 = sld [smem:[#allocation8 + $0xf]]
    %v243 = vstv %s242
    %v244 = vadd.f32 %v241, %v243
    %v245 = vtanh.pop %v244
    %s246 = sld [smem:[#allocation10 + $0xf]]
    %v247 = vstv %s246
    %v248 = vmul.f32 %v247, %v245
    %v249 = vadd.f32 %v238, %v248
    %s250 = sld [smem:[#allocation7 + $0x10]]
    %v251 = vstv %s250
    %v252 = vmul.f32 %v70, %v251
    %s253 = sld [smem:[#allocation8 + $0x10]]
    %v254 = vstv %s253
    %v255 = vadd.f32 %v252, %v254
    %v256 = vtanh.pop %v255
    %s257 = sld [smem:[#allocation10 + $0x10]]
    %v258 = vstv %s257
    %v259 = vmul.f32 %v258, %v256
    %v260 = vadd.f32 %v249, %v259
    %s261 = sld [smem:[#allocation7 + $0x11]]
    %v262 = vstv %s261
    %v263 = vmul.f32 %v70, %v262
    %s264 = sld [smem:[#allocation8 + $0x11]]
    %v265 = vstv %s264
    %v266 = vadd.f32 %v263, %v265
    %v267 = vtanh.pop %v266
    %s268 = sld [smem:[#allocation10 + $0x11]]
    %v269 = vstv %s268
    %v270 = vmul.f32 %v269, %v267
    %v271 = vadd.f32 %v260, %v270
    %s272 = sld [smem:[#allocation7 + $0x12]]
    %v273 = vstv %s272
    %v274 = vmul.f32 %v70, %v273
    %s275 = sld [smem:[#allocation8 + $0x12]]
    %v276 = vstv %s275
    %v277 = vadd.f32 %v274, %v276
    %v278 = vtanh.pop %v277
    %s279 = sld [smem:[#allocation10 + $0x12]]
    %v280 = vstv %s279
    %v281 = vmul.f32 %v280, %v278
    %v282 = vadd.f32 %v271, %v281
    %s283 = sld [smem:[#allocation7 + $0x13]]
    %v284 = vstv %s283
    %v285 = vmul.f32 %v70, %v284
    %s286 = sld [smem:[#allocation8 + $0x13]]
    %v287 = vstv %s286
    %v288 = vadd.f32 %v285, %v287
    %v289 = vtanh.pop %v288
    %s290 = sld [smem:[#allocation10 + $0x13]]
    %v291 = vstv %s290
    %v292 = vmul.f32 %v291, %v289
    %v293 = vadd.f32 %v282, %v292
    %s294 = sld [smem:[#allocation7 + $0x14]]
    %v295 = vstv %s294
    %v296 = vmul.f32 %v70, %v295
    %s297 = sld [smem:[#allocation8 + $0x14]]
    %v298 = vstv %s297
    %v299 = vadd.f32 %v296, %v298
    %v300 = vtanh.pop %v299
    %s301 = sld [smem:[#allocation10 + $0x14]]
    %v302 = vstv %s301
    %v303 = vmul.f32 %v302, %v300
    %v304 = vadd.f32 %v293, %v303
    %s305 = sld [smem:[#allocation7 + $0x15]]
    %v306 = vstv %s305
    %v307 = vmul.f32 %v70, %v306
    %s308 = sld [smem:[#allocation8 + $0x15]]
    %v309 = vstv %s308
    %v310 = vadd.f32 %v307, %v309
    %v311 = vtanh.pop %v310
    %s312 = sld [smem:[#allocation10 + $0x15]]
    %v313 = vstv %s312
    %v314 = vmul.f32 %v313, %v311
    %v315 = vadd.f32 %v304, %v314
    %s316 = sld [smem:[#allocation7 + $0x16]]
    %v317 = vstv %s316
    %v318 = vmul.f32 %v70, %v317
    %s319 = sld [smem:[#allocation8 + $0x16]]
    %v320 = vstv %s319
    %v321 = vadd.f32 %v318, %v320
    %v322 = vtanh.pop %v321
    %s323 = sld [smem:[#allocation10 + $0x16]]
    %v324 = vstv %s323
    %v325 = vmul.f32 %v324, %v322
    %v326 = vadd.f32 %v315, %v325
    %s327 = sld [smem:[#allocation7 + $0x17]]
    %v328 = vstv %s327
    %v329 = vmul.f32 %v70, %v328
    %s330 = sld [smem:[#allocation8 + $0x17]]
    %v331 = vstv %s330
    %v332 = vadd.f32 %v329, %v331
    %v333 = vtanh.pop %v332
    %s334 = sld [smem:[#allocation10 + $0x17]]
    %v335 = vstv %s334
    %v336 = vmul.f32 %v335, %v333
    %v337 = vadd.f32 %v326, %v336
    %s338 = sld [smem:[#allocation7 + $0x18]]
    %v339 = vstv %s338
    %v340 = vmul.f32 %v70, %v339
    %s341 = sld [smem:[#allocation8 + $0x18]]
    %v342 = vstv %s341
    %v343 = vadd.f32 %v340, %v342
    %v344 = vtanh.pop %v343
    %s345 = sld [smem:[#allocation10 + $0x18]]
    %v346 = vstv %s345
    %v347 = vmul.f32 %v346, %v344
    %v348 = vadd.f32 %v337, %v347
    %s349 = sld [smem:[#allocation7 + $0x19]]
    %v350 = vstv %s349
    %v351 = vmul.f32 %v70, %v350
    %s352 = sld [smem:[#allocation8 + $0x19]]
    %v353 = vstv %s352
    %v354 = vadd.f32 %v351, %v353
    %v355 = vtanh.pop %v354
    %s356 = sld [smem:[#allocation10 + $0x19]]
    %v357 = vstv %s356
    %v358 = vmul.f32 %v357, %v355
    %v359 = vadd.f32 %v348, %v358
    %s360 = sld [smem:[#allocation7 + $0x1a]]
    %v361 = vstv %s360
    %v362 = vmul.f32 %v70, %v361
    %s363 = sld [smem:[#allocation8 + $0x1a]]
    %v364 = vstv %s363
    %v365 = vadd.f32 %v362, %v364
    %v366 = vtanh.pop %v365
    %s367 = sld [smem:[#allocation10 + $0x1a]]
    %v368 = vstv %s367
    %v369 = vmul.f32 %v368, %v366
    %v370 = vadd.f32 %v359, %v369
    %s371 = sld [smem:[#allocation7 + $0x1b]]
    %v372 = vstv %s371
    %v373 = vmul.f32 %v70, %v372
    %s374 = sld [smem:[#allocation8 + $0x1b]]
    %v375 = vstv %s374
    %v376 = vadd.f32 %v373, %v375
    %v377 = vtanh.pop %v376
    %s378 = sld [smem:[#allocation10 + $0x1b]]
    %v379 = vstv %s378
    %v380 = vmul.f32 %v379, %v377
    %v381 = vadd.f32 %v370, %v380
    %s382 = sld [smem:[#allocation7 + $0x1c]]
    %v383 = vstv %s382
    %v384 = vmul.f32 %v70, %v383
    %s385 = sld [smem:[#allocation8 + $0x1c]]
    %v386 = vstv %s385
    %v387 = vadd.f32 %v384, %v386
    %v388 = vtanh.pop %v387
    %s389 = sld [smem:[#allocation10 + $0x1c]]
    %v390 = vstv %s389
    %v391 = vmul.f32 %v390, %v388
    %v392 = vadd.f32 %v381, %v391
    %s393 = sld [smem:[#allocation7 + $0x1d]]
    %v394 = vstv %s393
    %v395 = vmul.f32 %v70, %v394
    %s396 = sld [smem:[#allocation8 + $0x1d]]
    %v397 = vstv %s396
    %v398 = vadd.f32 %v395, %v397
    %v399 = vtanh.pop %v398
    %s400 = sld [smem:[#allocation10 + $0x1d]]
    %v401 = vstv %s400
    %v402 = vmul.f32 %v401, %v399
    %v403 = vadd.f32 %v392, %v402
    %s404 = sld [smem:[#allocation7 + $0x1e]]
    %v405 = vstv %s404
    %v406 = vmul.f32 %v70, %v405
    %s407 = sld [smem:[#allocation8 + $0x1e]]
    %v408 = vstv %s407
    %v409 = vadd.f32 %v406, %v408
    %v410 = vtanh.pop %v409
    %s411 = sld [smem:[#allocation10 + $0x1e]]
    %v412 = vstv %s411
    %v413 = vmul.f32 %v412, %v410
    %v414 = vadd.f32 %v403, %v413
    %s415 = sld [smem:[#allocation7 + $0x1f]]
    %v416 = vstv %s415
    %v417 = vmul.f32 %v70, %v416
    %s418 = sld [smem:[#allocation8 + $0x1f]]
    %v419 = vstv %s418
    %v420 = vadd.f32 %v417, %v419
    %v421 = vtanh.pop %v420
    %s422 = sld [smem:[#allocation10 + $0x1f]]
    %v423 = vstv %s422
    %v424 = vmul.f32 %v423, %v421
    %v425 = vadd.f32 %v414, %v424
    %426 = vst [vmem:[#allocation11] sm:$0xff] %v425
    // Predicated region
    $region38: #{tpu_custom_call.1} parent=1 // pred_check
      _
    $region39: #{tpu_custom_call.1} parent=1 // pred_check_branch
      %428 = sbr.rel (0) target = $region41
    $region40: #{tpu_custom_call.1} parent=1 // pred_region
      %s430 = ssub.s32 128, 128
      %431 = vsyncadd [#allocation5], %s430
      %s433 = sshll.u32 [#allocation11], 4
      %s434 = int_to_ptr.vmem [resolvable:$true] %s433
      %436 = dma.vmem_to_hbm [thread:$0]  %s434, 128, %s5, [#allocation5]
    $region41: #{tpu_custom_call.1} parent=1 // pred_fallthru
      _
    // Predicated region
    $region42: #{tpu_custom_call.1} parent=1 // pred_check
      _
    $region43: #{tpu_custom_call.1} parent=1 // pred_check_branch
      %438 = sbr.rel (0) target = $region45
    $region44: #{tpu_custom_call.1} parent=1 // pred_region
      %439 = dma.done [#allocation5], 128
    $region45: #{tpu_custom_call.1} parent=1 // pred_fallthru
      _
    %440 = vsyncpa [#allocation4], 1
    %441 = vsyncpa [#allocation5], 1
    %442 = vsyncpa [#allocation6], 1
    %443 = vsyncpa [#allocation9], 1

</llo_original>
